<compile_context>
chip_gen: v6e
topology: v6e:2x2x1
jax: 0.10.0
libtpu: 0.0.40
codegen_flags: <defaults>
</compile_context>

<pallas_src>
import functools

import jax
import jax.numpy as jnp
from jax.experimental import pallas as pl
from jax.experimental.pallas import tpu as pltpu


# ---------------------------------------------------------------------------
# In-kernel noise generation (hardware-PRNG path; TPU / Mosaic only).
# ---------------------------------------------------------------------------

def _uniform_open01(shape):
    """Uniform in (0,1) from the hardware PRNG via the exponent bit-trick.

    mantissa | 0x3F800001 -> float in [1 + 2^-23, 2 - 2^-23]; subtracting 1.0
    gives (0,1) with both log(u) and log(1-u) finite.  23-bit resolution.
    """
    bits = pltpu.prng_random_bits(shape)
    if bits.dtype != jnp.int32:
        bits = pltpu.bitcast(bits, jnp.int32)
    m = jnp.bitwise_or(jnp.bitwise_and(bits, jnp.int32(0x007FFFFF)),
                       jnp.int32(0x3F800001))
    return pltpu.bitcast(m, jnp.float32) - 1.0


def _erfinv_central(x):
    """Giles (2010) erfinv, central polynomial only (VALU diet, per review).

    The w >= 5 tail branch (second 9-term polynomial + sqrt + select) is
    dropped; w is clamped at 8 so the extrapolated central polynomial stays
    within ~1% and the resulting normal is truncated at roughly +-3.8 sigma,
    which matches the truncation the 23-bit uniform already imposed.
    Fidelity tradeoff applies to injected noise only.
    """
    w = jnp.minimum(-jnp.log((1.0 - x) * (1.0 + x)), 8.0)
    ws = w - 2.5
    p = jnp.float32(2.81022636e-08)
    for c in (3.43273939e-07, -3.5233877e-06, -4.39150654e-06, 2.1858087e-04,
              -1.25372503e-03, -4.17768164e-03, 2.46640727e-01, 1.50140941e+00):
        p = p * ws + jnp.float32(c)
    return p * x


def _standard_normal(shape):
    """N(0,1) via inverse CDF of a hardware-PRNG uniform (log/VALU only)."""
    u = _uniform_open01(shape)
    return jnp.float32(1.4142135623730951) * _erfinv_central(2.0 * u - 1.0)


def _logistic(shape):
    """Logistic(0,1) == difference of two iid Gumbels, from one uniform."""
    u = _uniform_open01(shape)
    return jnp.log(u) - jnp.log(1.0 - u)


# ---------------------------------------------------------------------------
# Kernels.
# ---------------------------------------------------------------------------

def _lwta_body(x, ran, eps, inv_temp, out_ref):
    # softmax over the 2 competitors == sigmoid of the difference; one tanh.
    t = (x - ran + eps) * inv_temp
    xi0 = 0.5 + 0.5 * jnp.tanh(0.5 * t)
    out_ref[0, :, :] = (x * xi0).astype(out_ref.dtype)
    out_ref[1, :, :] = (ran * (1.0 - xi0)).astype(out_ref.dtype)


def _lwta_kernel_hwrng(inv_temp, seed_ref, x_ref, out_ref):
    # Independent RNG stream per grid step (also keeps per-TC streams distinct).
    pltpu.prng_seed(seed_ref[0], pl.program_id(0))
    x = x_ref[...].astype(jnp.float32)           # upcast in-register if bf16
    _lwta_body(x, _standard_normal(x.shape), _logistic(x.shape),
               inv_temp, out_ref)


def _lwta_kernel_noise(inv_temp, x_ref, ran_ref, eps_ref, out_ref):
    x = x_ref[...].astype(jnp.float32)
    _lwta_body(x, ran_ref[...], eps_ref[...], inv_temp, out_ref)


# ---------------------------------------------------------------------------
# Wrapper.
# ---------------------------------------------------------------------------

def lwta_forward(x, key, competitors, temp=1.67, hard=False, *,
                 out_dtype=None, block_rows=None, use_hw_rng=None, noise=None):
    """Pallas LWTA forward (A == 1 branch of the PyTorch module, hard=False).

    Returns (2, B, T, Dp): channel 0 = x * xi0, channel 1 = ran * xi1, with
    the competitor axis LEADING (TPU lane-friendly); moveaxis(out, 0, -1)
    recovers the PyTorch trailing layout.  Zero-padded feature columns
    (D % U != 0) are kept, matching the (dead) original strip code path.
    `noise=(ran, eps)` injects explicit noise (used for verification).
    """
    if hard:
        raise NotImplementedError(
            "hard=True straight-through sampling is not implemented")
    U = 2 if competitors == 1 else competitors
    B, T, D = x.shape
    mod = D % U
    pad_d = (U - mod) if mod else 0
    if pad_d:  # F.pad(..., (0, U - mod, 0, 0)) -> zero-pad last dim (spec)
        x = jnp.pad(x, ((0, 0), (0, 0), (0, pad_d)))
    Dp = D + pad_d
    R = B * T
    x2d = x.reshape(R, Dp)                       # free reshape, no HBM traffic
    if out_dtype is None:
        out_dtype = x.dtype

    use_hw = (jax.default_backend() == "tpu") if use_hw_rng is None else use_hw_rng
    if noise is not None:
        use_hw = False

    # Tile sizing: ~2 MiB of f32 input per grid step (amortizes the ~0.35 us
    # per-step overhead), capped so that I/O double-buffers + elementwise
    # intermediates stay well inside v7x's 64 MiB VMEM.
    if block_rows is None:
        block_rows = max(8, min(2048, ((512 * 1024) // max(Dp, 1)) // 8 * 8))
    block_rows = R if block_rows >= R else max(8, block_rows // 8 * 8)
    grid = (pl.cdiv(R, block_rows),)

    x_spec = pl.BlockSpec((block_rows, Dp), lambda i, *_: (i, 0))
    out_spec = pl.BlockSpec((2, block_rows, Dp), lambda i, *_: (0, i, 0))
    out_shape = jax.ShapeDtypeStruct((2, R, Dp), out_dtype)
    cparams = pltpu.CompilerParams(dimension_semantics=("parallel",),
                                   vmem_limit_bytes=48 * 1024 * 1024)

    n_elt = R * Dp
    out_bytes = 2 * n_elt * jnp.dtype(out_dtype).itemsize
    in_bytes = n_elt * jnp.dtype(x.dtype).itemsize
    # NOTE: temp folded in as a compile-time constant -> one recompile per
    # distinct temp value (minor; the module's call-site uses the default).
    inv_temp = float(1.0 / float(temp))

    if use_hw:
        seed = jax.random.randint(key, (1,), 0, jnp.iinfo(jnp.int32).max,
                                  dtype=jnp.int32)
        cost = pl.CostEstimate(flops=60 * n_elt, transcendentals=4 * n_elt,
                               bytes_accessed=in_bytes + out_bytes)
        out2d = pl.pallas_call(
            functools.partial(_lwta_kernel_hwrng, inv_temp),
            out_shape=out_shape,
            grid_spec=pltpu.PrefetchScalarGridSpec(
                num_scalar_prefetch=1, grid=grid,
                in_specs=[x_spec], out_specs=out_spec),
            compiler_params=cparams,
            cost_estimate=cost,
        )(seed, x2d)
    else:
        if noise is not None:
            ran, eps = noise
            if pad_d:
                ran = jnp.pad(ran, ((0, 0), (0, 0), (0, pad_d)))
                eps = jnp.pad(eps, ((0, 0), (0, 0), (0, pad_d)))
            ran2d = ran.reshape(R, Dp).astype(jnp.float32)
            eps2d = eps.reshape(R, Dp).astype(jnp.float32)
        else:
            k_ran, k_eps = jax.random.split(key)
            ran2d = jax.random.normal(k_ran, (R, Dp), dtype=jnp.float32)
            eps2d = jax.random.logistic(k_eps, (R, Dp), dtype=jnp.float32)
        n_spec = pl.BlockSpec((block_rows, Dp), lambda i, *_: (i, 0))
        cost = pl.CostEstimate(flops=10 * n_elt, transcendentals=n_elt,
                               bytes_accessed=in_bytes + 8 * n_elt + out_bytes)
        out2d = pl.pallas_call(
            functools.partial(_lwta_kernel_noise, inv_temp),
            out_shape=out_shape,
            grid=grid,
            in_specs=[x_spec, n_spec, n_spec],
            out_specs=out_spec,
            compiler_params=cparams,
            cost_estimate=cost,
        )(x2d, ran2d, eps2d)

    return out2d.reshape(2, B, T, Dp)


def lwta_reference(x, ran, eps, temp):
    """Pure-JAX reference in the original softmax form, using the same noise.
    The Gumbel difference `eps` is folded into channel 0 (softmax over a pair
    is shift-invariant, so this equals softmax((lr + Gumbel)/temp))."""
    lr = jnp.stack((x, ran), axis=-1)                    # torch.cat((logits, ran), -1)
    g = jnp.stack((eps, jnp.zeros_like(eps)), axis=-1)
    xi = jax.nn.softmax((lr + g) / temp, axis=-1)
    out = lr * xi
    return jnp.moveaxis(out, -1, 0)                      # (2, B, T, Dp) layout


if __name__ == "__main__":
    # Unused module parameter (posterior_mean is never read in forward).
    posterior_mean = jnp.zeros((1, 1), dtype=jnp.float32)

    B, T, D = 2, 8, 32
    U = 4          # competitors
    temp = 1.67    # default `temp` used by concrete_sample in the A == 1 branch

    root = jax.random.PRNGKey(0)
    k_x, k_noise, k_ran, k_eps = jax.random.split(root, 4)
    x = jax.random.normal(k_x, (B, T, D), dtype=jnp.float32)

    # 1) Deterministic check: inject known noise, compare against the pure-JAX
    #    softmax-form reference using the exact same noise.
    ran = jax.random.normal(k_ran, (B, T, D), dtype=jnp.float32)
    eps = jax.random.logistic(k_eps, (B, T, D), dtype=jnp.float32)
    out = jax.block_until_ready(
        lwta_forward(x, k_noise, competitors=U, temp=temp, noise=(ran, eps)))
    assert out.shape == (2, B, T, D), out.shape
    assert bool(jnp.all(jnp.isfinite(out)))
    ref = lwta_reference(x, ran, eps, temp)
    max_err = float(jnp.max(jnp.abs(out - ref)))
    assert jnp.allclose(out, ref, rtol=2e-5, atol=2e-5), max_err
    # Structural check: xi0 in (0,1) => |out0| <= |x|.
    assert bool(jnp.all(jnp.abs(out[0]) <= jnp.abs(x) + 1e-6))

    # 2) Production path: hardware PRNG on TPU, wrapper-generated noise elsewhere.
    out_fast = jax.block_until_ready(
        lwta_forward(x, k_noise, competitors=U, temp=temp))
    assert out_fast.shape == (2, B, T, D), out_fast.shape
    assert bool(jnp.all(jnp.isfinite(out_fast)))
    assert bool(jnp.all(jnp.abs(out_fast[0]) <= jnp.abs(x) + 1e-6))

    # 3) Ragged feature dim (D % U != 0) -> zero-padded to the next multiple.
    x2 = jax.random.normal(k_x, (B, T, 30), dtype=jnp.float32)
    out2 = jax.block_until_ready(
        lwta_forward(x2, k_noise, competitors=U, temp=temp))
    assert out2.shape == (2, B, T, 32), out2.shape
    assert bool(jnp.all(jnp.isfinite(out2)))

    # 4) bf16 in -> bf16 out (halves store bytes on v5e); math stays f32.
    x_bf = x.astype(jnp.bfloat16)
    out_bf = jax.block_until_ready(
        lwta_forward(x_bf, k_noise, competitors=U, temp=temp))
    assert out_bf.dtype == jnp.bfloat16 and out_bf.shape == (2, B, T, D)
    assert bool(jnp.all(jnp.isfinite(out_bf.astype(jnp.float32))))

    # 5) hard=True is not implemented -> must raise, not be silently ignored.
    try:
        lwta_forward(x, k_noise, competitors=U, temp=temp, hard=True)
        raise AssertionError("hard=True should have raised NotImplementedError")
    except NotImplementedError:
        pass

    print("KERNEL_OK")
</pallas_src>

<mosaic_0001>
module attributes {stable_mosaic.version = 11 : i64} {
  func.func @_lwta_kernel_noise(%arg0: i32, %arg1: memref<16x32xf32, #tpu.memory_space<vmem>>, %arg2: memref<16x32xf32, #tpu.memory_space<vmem>>, %arg3: memref<16x32xf32, #tpu.memory_space<vmem>>, %arg4: memref<2x16x32xf32, #tpu.memory_space<vmem>>) attributes {dimension_semantics = [#tpu.dimension_semantics<parallel>], iteration_bounds = array<i64: 1>, scalar_prefetch = 0 : i64, scratch_operands = 0 : i64, tpu.core_type = #tpu.core_type<tc>, window_params = [{transform_indices = @transform_0, window_bounds = array<i64: 16, 32>}, {transform_indices = @transform_1, window_bounds = array<i64: 16, 32>}, {transform_indices = @transform_2, window_bounds = array<i64: 16, 32>}, {transform_indices = @transform_3, window_bounds = array<i64: 2, 16, 32>}]} {
    %c0 = arith.constant 0 : index
    %c0_0 = arith.constant 0 : index
    %0 = vector.load %arg1[%c0, %c0_0] : memref<16x32xf32, #tpu.memory_space<vmem>>, vector<16x32xf32>
    %c0_1 = arith.constant 0 : index
    %c0_2 = arith.constant 0 : index
    %1 = vector.load %arg2[%c0_1, %c0_2] : memref<16x32xf32, #tpu.memory_space<vmem>>, vector<16x32xf32>
    %c0_3 = arith.constant 0 : index
    %c0_4 = arith.constant 0 : index
    %2 = vector.load %arg3[%c0_3, %c0_4] : memref<16x32xf32, #tpu.memory_space<vmem>>, vector<16x32xf32>
    %3 = arith.subf %0, %1 : vector<16x32xf32>
    %4 = arith.addf %3, %2 : vector<16x32xf32>
    %cst = arith.constant 0.598802388 : f32
    %5 = vector.broadcast %cst : f32 to vector<16x32xf32>
    %6 = arith.mulf %4, %5 : vector<16x32xf32>
    %cst_5 = arith.constant 5.000000e-01 : f32
    %7 = vector.broadcast %cst_5 : f32 to vector<16x32xf32>
    %8 = arith.mulf %7, %6 : vector<16x32xf32>
    %9 = math.tanh %8 : vector<16x32xf32>
    %cst_6 = arith.constant 5.000000e-01 : f32
    %10 = vector.broadcast %cst_6 : f32 to vector<16x32xf32>
    %11 = arith.mulf %10, %9 : vector<16x32xf32>
    %cst_7 = arith.constant 5.000000e-01 : f32
    %12 = vector.broadcast %cst_7 : f32 to vector<16x32xf32>
    %13 = arith.addf %12, %11 : vector<16x32xf32>
    %14 = arith.mulf %0, %13 : vector<16x32xf32>
    %c0_8 = arith.constant 0 : index
    %c0_9 = arith.constant 0 : index
    %c0_10 = arith.constant 0 : index
    %15 = vector.load %arg4[%c0_8, %c0_9, %c0_10] : memref<2x16x32xf32, #tpu.memory_space<vmem>>, vector<1x16x32xf32>
    %16 = vector.shape_cast %15 : vector<1x16x32xf32> to vector<16x32xf32>
    %17 = vector.shape_cast %14 : vector<16x32xf32> to vector<1x16x32xf32>
    tpu.vector_store %arg4[%c0_8, %c0_9, %c0_10], %17 {strides = array<i32>} : memref<2x16x32xf32, #tpu.memory_space<vmem>>, vector<1x16x32xf32>,
    %cst_11 = arith.constant 1.000000e+00 : f32
    %18 = vector.broadcast %cst_11 : f32 to vector<16x32xf32>
    %19 = arith.subf %18, %13 : vector<16x32xf32>
    %20 = arith.mulf %1, %19 : vector<16x32xf32>
    %c1 = arith.constant 1 : index
    %c0_12 = arith.constant 0 : index
    %c0_13 = arith.constant 0 : index
    %21 = vector.load %arg4[%c1, %c0_12, %c0_13] : memref<2x16x32xf32, #tpu.memory_space<vmem>>, vector<1x16x32xf32>
    %22 = vector.shape_cast %21 : vector<1x16x32xf32> to vector<16x32xf32>
    %23 = vector.shape_cast %20 : vector<16x32xf32> to vector<1x16x32xf32>
    tpu.vector_store %arg4[%c1, %c0_12, %c0_13], %23 {strides = array<i32>} : memref<2x16x32xf32, #tpu.memory_space<vmem>>, vector<1x16x32xf32>,
    return
  }
  func.func @transform_0(%arg0: i32) -> (i32, i32) {
    %c0_i32 = arith.constant 0 : i32
    %c0_i32_0 = arith.constant 0 : i32
    return %arg0, %c0_i32 : i32, i32
  }
  func.func @transform_1(%arg0: i32) -> (i32, i32) {
    %c0_i32 = arith.constant 0 : i32
    %c0_i32_0 = arith.constant 0 : i32
    return %arg0, %c0_i32 : i32, i32
  }
  func.func @transform_2(%arg0: i32) -> (i32, i32) {
    %c0_i32 = arith.constant 0 : i32
    %c0_i32_0 = arith.constant 0 : i32
    return %arg0, %c0_i32 : i32, i32
  }
  func.func @transform_3(%arg0: i32) -> (i32, i32, i32) {
    %c0_i32 = arith.constant 0 : i32
    %c0_i32_0 = arith.constant 0 : i32
    %c0_i32_1 = arith.constant 0 : i32
    return %c0_i32, %arg0, %c0_i32_0 : i32, i32, i32
  }
}

</mosaic_0001>

<llo_original>
// kernel: tpu_custom_call.1
$region0: #{tpu_custom_call.1}
  #allocation0 [shape = 'u32[]', space=smem, size = 0x4, offset = 0x4, fixed_abs, tag = 'smem constant byte address 0x4 - core index']
  #allocation1 [shape = 'u32[144,128]{1,0:T(1,128)}', space=vmem, size = 0x12000, scoped, tag = 'internal scratch']
  %s0 = inlined_call_operand.hbm [shape: f32[16,32], index: 0, kind: input, shape index: {}]
  %s1 = inlined_call_operand.hbm [shape: f32[16,32], index: 1, kind: input, shape index: {}]
  %s2 = inlined_call_operand.hbm [shape: f32[16,32], index: 2, kind: input, shape index: {}]
  %s3 = inlined_call_operand.hbm [shape: f32[2,16,32], index: 3, kind: output, shape index: {}]
  %s4 = sld [smem:[#allocation0]]
  $region34: #{tpu_custom_call.1} parent=0
    _
  %s6 = ssub.s32 1, %s4
  %s7 = scalar_select 0, %s6, %s4
  $region1: #{tpu_custom_call.1} parent=0
    #allocation2 [shape = 'u8[8192]{0}', space=vmem, size = 0x2000, scoped, tag = 'input window, operand 0, single buffered']
    #allocation3 [shape = 's32[1]{0}', space=sflag, size = 0x4, scoped, tag = 'scoped memory for tpu_custom_call.1']
    #allocation4 [shape = 's32[1]{0}', space=sflag, size = 0x4, scoped, tag = 'scoped memory for tpu_custom_call.1']
    #allocation5 [shape = 'u8[8192]{0}', space=vmem, size = 0x2000, scoped, tag = 'input window, operand 1, single buffered']
    #allocation6 [shape = 's32[1]{0}', space=sflag, size = 0x4, scoped, tag = 'scoped memory for tpu_custom_call.1']
    #allocation7 [shape = 'u8[8192]{0}', space=vmem, size = 0x2000, scoped, tag = 'input window, operand 2, single buffered']
    #allocation8 [shape = 'u8[16384]{0}', space=vmem, size = 0x4000, scoped, tag = 'output window, operand 0, single buffered']
    %8 = vsyncpa [#allocation3], 0
    %9 = vsyncpa [#allocation6], 0
    %10 = vsyncpa [#allocation4], 0
    // Predicated region
    $region2: #{tpu_custom_call.1} parent=1 // pred_check
      _
    $region3: #{tpu_custom_call.1} parent=1 // pred_check_branch
      %12 = sbr.rel (0) target = $region5
    $region4: #{tpu_custom_call.1} parent=1 // pred_region
      %s14 = ssub.s32 256, 256
      %15 = vsyncadd [#allocation3], %s14
      %s16 = sshll.u32 [#allocation2], 4
      %s17 = int_to_ptr.vmem [resolvable:$true] %s16
      %22 = dma.hbm_to_vmem [thread:$0]  %s0, 256, %s17, [#allocation3], 128, 128, 8
    $region5: #{tpu_custom_call.1} parent=1 // pred_fallthru
      _
    // Predicated region
    $region6: #{tpu_custom_call.1} parent=1 // pred_check
      _
    $region7: #{tpu_custom_call.1} parent=1 // pred_check_branch
      %24 = sbr.rel (0) target = $region9
    $region8: #{tpu_custom_call.1} parent=1 // pred_region
      %s26 = ssub.s32 256, 256
      %27 = vsyncadd [#allocation6], %s26
      %s28 = sshll.u32 [#allocation5], 4
      %s29 = int_to_ptr.vmem [resolvable:$true] %s28
      %34 = dma.hbm_to_vmem [thread:$0]  %s1, 256, %s29, [#allocation6], 128, 128, 8
    $region9: #{tpu_custom_call.1} parent=1 // pred_fallthru
      _
    // Predicated region
    $region10: #{tpu_custom_call.1} parent=1 // pred_check
      _
    $region11: #{tpu_custom_call.1} parent=1 // pred_check_branch
      %36 = sbr.rel (0) target = $region13
    $region12: #{tpu_custom_call.1} parent=1 // pred_region
      %s38 = ssub.s32 256, 256
      %39 = vsyncadd [#allocation6], %s38
      %s40 = sshll.u32 [#allocation7], 4
      %s41 = int_to_ptr.vmem [resolvable:$true] %s40
      %46 = dma.hbm_to_vmem [thread:$0]  %s2, 256, %s41, [#allocation6], 128, 128, 8
    $region13: #{tpu_custom_call.1} parent=1 // pred_fallthru
      _
    // Predicated region
    $region14: #{tpu_custom_call.1} parent=1 // pred_check
      _
    $region15: #{tpu_custom_call.1} parent=1 // pred_check_branch
      %48 = sbr.rel (0) target = $region17
    $region16: #{tpu_custom_call.1} parent=1 // pred_region
      %49 = dma.done [#allocation3], 256
    $region17: #{tpu_custom_call.1} parent=1 // pred_fallthru
      _
    // Predicated region
    $region18: #{tpu_custom_call.1} parent=1 // pred_check
      _
    $region19: #{tpu_custom_call.1} parent=1 // pred_check_branch
      %51 = sbr.rel (0) target = $region21
    $region20: #{tpu_custom_call.1} parent=1 // pred_region
      %52 = dma.done [#allocation6], 256
    $region21: #{tpu_custom_call.1} parent=1 // pred_fallthru
      _
    // Predicated region
    $region22: #{tpu_custom_call.1} parent=1 // pred_check
      _
    $region23: #{tpu_custom_call.1} parent=1 // pred_check_branch
      %54 = sbr.rel (0) target = $region25
    $region24: #{tpu_custom_call.1} parent=1 // pred_region
      %55 = dma.done [#allocation6], 256
    $region25: #{tpu_custom_call.1} parent=1 // pred_fallthru
      _
    %v56 = vld [vmem:[#allocation2] sm:$0xff]
    %v57 = vld [vmem:[#allocation2 + $0x8] sm:$0xff]
    %v58 = vld [vmem:[#allocation5] sm:$0xff]
    %v59 = vld [vmem:[#allocation5 + $0x8] sm:$0xff]
    %v60 = vld [vmem:[#allocation7] sm:$0xff]
    %v61 = vld [vmem:[#allocation7 + $0x8] sm:$0xff]
    %v62 = vsub.f32 %v56, %v58
    %v63 = vsub.f32 %v57, %v59
    %v64 = vadd.f32 %v62, %v60
    %v65 = vadd.f32 %v63, %v61
    %v66 = vmul.f32 %v64, 0.5988024
    %v67 = vmul.f32 %v65, 0.5988024
    %v68 = vmul.f32 %v66, 0.5
    %v69 = vmul.f32 %v67, 0.5
    %v70 = vtanh.pop %v68
    %v71 = vtanh.pop %v69
    %v72 = vmul.f32 %v70, 0.5
    %v73 = vmul.f32 %v71, 0.5
    %v74 = vadd.f32 %v72, 0.5
    %v75 = vadd.f32 %v73, 0.5
    %v76 = vmul.f32 %v56, %v74
    %v77 = vmul.f32 %v57, %v75
    %vm78 = vcmask 261120
    %79 = vst.msk [vmem:[#allocation8] sm:$0xff] %vm78, %v76
    %80 = vst.msk [vmem:[#allocation8 + $0x8] sm:$0xff] %vm78, %v77
    %v81 = vsub.f32 1.0, %v74
    %v82 = vsub.f32 1.0, %v75
    %v83 = vmul.f32 %v58, %v81
    %v84 = vmul.f32 %v59, %v82
    %s85 = scalar_lea.vmem [#allocation8], 16
    %86 = vst.msk [vmem:[%s85] sm:$0xff] %vm78, %v83
    %87 = vst.msk [vmem:[%s85 + $0x8] sm:$0xff] %vm78, %v84
    // Predicated region
    $region26: #{tpu_custom_call.1} parent=1 // pred_check
      _
    $region27: #{tpu_custom_call.1} parent=1 // pred_check_branch
      %89 = sbr.rel (0) target = $region29
    $region28: #{tpu_custom_call.1} parent=1 // pred_region
      %s91 = ssub.s32 512, 512
      %92 = vsyncadd [#allocation4], %s91
      %s93 = sshll.u32 [#allocation8], 4
      %s94 = int_to_ptr.vmem [resolvable:$true] %s93
      %99 = dma.vmem_to_hbm [thread:$0]  %s94, 512, %s3, [#allocation4], 128, 128, 8
    $region29: #{tpu_custom_call.1} parent=1 // pred_fallthru
      _
    // Predicated region
    $region30: #{tpu_custom_call.1} parent=1 // pred_check
      _
    $region31: #{tpu_custom_call.1} parent=1 // pred_check_branch
      %101 = sbr.rel (0) target = $region33
    $region32: #{tpu_custom_call.1} parent=1 // pred_region
      %102 = dma.done [#allocation4], 512
    $region33: #{tpu_custom_call.1} parent=1 // pred_fallthru
      _
    %103 = vsyncpa [#allocation3], 1
    %104 = vsyncpa [#allocation6], 1
    %105 = vsyncpa [#allocation4], 1

</llo_original>
